<compile_context>
chip_gen: v7x
topology: tpu7x:2x2x1
jax: 0.10.0
libtpu: 0.0.40
codegen_flags: <defaults>
</compile_context>

<pallas_src>
import functools

import jax
import jax.numpy as jnp
from jax.experimental import pallas as pl
from jax.experimental.pallas import tpu as pltpu

EPS = 1e-5
H1, H2, H3, H4 = 512, 256, 128, 64
H4_PAD = 128  # lane-pad the 64-wide layer to a full 128-lane vreg


def _bn_relu(z, gamma, beta):
    """Training-mode BatchNorm1d (biased var, centered two-pass) + ReLU, all f32.

    Batch-wide work is 3 wide VPU ops (sub, mul, add) + max; stats live on the
    tiny (1, N) rows. rsqrt goes to the EUP (free slot).
    """
    mean = jnp.mean(z, axis=0, keepdims=True)           # (1, N)
    zc = z - mean                                       # (B, N)
    var = jnp.mean(zc * zc, axis=0, keepdims=True)      # (1, N), no cancellation
    scale = gamma * jax.lax.rsqrt(var + EPS)            # (1, N)
    return jnp.maximum(zc * scale + beta, 0.0)          # (B, N)


def _make_kernel(seg_offsets, seg_sizes):
    """Build the gridless kernel with static (128-aligned) packed-vector offsets."""

    def mlp_kernel(x_ref, w1_ref, w2_ref, w3_ref, w4_ref, w5_ref, vec_ref, o_ref):
        def seg(name):
            off, n = seg_offsets[name], seg_sizes[name]
            return vec_ref[:, off:off + n]              # static, lane-aligned slice

        # layer 1: Linear(in, 512) + ReLU   (bf16 operands, f32 accumulate)
        h = jnp.dot(x_ref[...], w1_ref[...],
                    preferred_element_type=jnp.float32) + seg("b1")
        h = jnp.maximum(h, 0.0)

        # layers 2-4: Linear + BatchNorm1d(train) + ReLU.
        # Linear biases b2/b3/b4 omitted: they cancel under BN mean subtraction.
        # TODO(synk): re-add them if this kernel is reused for eval-mode BN
        # (running stats), where they no longer cancel.
        for w_ref, gname, bname in ((w2_ref, "g2", "be2"),
                                    (w3_ref, "g3", "be3"),
                                    (w4_ref, "g4", "be4")):
            z = jnp.dot(h.astype(jnp.bfloat16), w_ref[...],
                        preferred_element_type=jnp.float32)
            h = _bn_relu(z, seg(gname), seg(bname))

        # layer 5: Linear(128-padded, out_pad) + ReLU (lane-dense unmasked store)
        z = jnp.dot(h.astype(jnp.bfloat16), w5_ref[...],
                    preferred_element_type=jnp.float32) + seg("b5")
        o_ref[...] = jnp.maximum(z, 0.0)

    return mlp_kernel


def init_params(key, input_features, output_features):
    """Deterministic parameter init (shapes match the PyTorch module).

    Linear weights are stored pre-transposed to (in, out) and in bf16 so the
    kernel's HBM->VMEM DMA moves half the bytes. Biases / BN affine stay f32.
    b2/b3/b4 exist for parity with the PyTorch module but are mathematical
    no-ops under training-mode BN (only the reference uses them).
    """
    dims = [input_features, H1, H2, H3, H4, output_features]
    params = {}
    keys = jax.random.split(key, 2 * (len(dims) - 1))
    ki = 0
    for li in range(5):
        fan_in, fan_out = dims[li], dims[li + 1]
        bound = 1.0 / jnp.sqrt(float(fan_in))
        params[f"w{li+1}"] = jax.random.uniform(
            keys[ki], (fan_in, fan_out), jnp.float32, -bound, bound
        ).astype(jnp.bfloat16)
        ki += 1
        params[f"b{li+1}"] = jax.random.uniform(
            keys[ki], (1, fan_out), jnp.float32, -bound, bound)
        ki += 1
    # BatchNorm affine params for layers 2, 3, 4 (PyTorch init: gamma=1, beta=0)
    for li, n in zip((2, 3, 4), (H2, H3, H4)):
        params[f"g{li}"] = jnp.ones((1, n), jnp.float32)
        params[f"be{li}"] = jnp.zeros((1, n), jnp.float32)
    return params


def network_forward(x, params, output_features):
    B, in_features = x.shape
    out_pad = pl.cdiv(output_features, 128) * 128

    # ---- lane-pad layer 4 (64 -> 128) and the output layer (out -> out_pad) ----
    # gamma/beta padded with ZEROS so padded BN columns emit exactly 0; w5's
    # padded zero rows then contribute nothing -> bit-equivalent on real outputs.
    w4 = jnp.pad(params["w4"], ((0, 0), (0, H4_PAD - H4)))
    g4 = jnp.pad(params["g4"], ((0, 0), (0, H4_PAD - H4)))
    be4 = jnp.pad(params["be4"], ((0, 0), (0, H4_PAD - H4)))
    w5 = jnp.pad(params["w5"],
                 ((0, H4_PAD - H4), (0, out_pad - output_features)))
    b5 = jnp.pad(params["b5"], ((0, 0), (0, out_pad - output_features)))

    # ---- pack the nine tiny (1, N) f32 vectors into ONE 128-aligned DMA ----
    segs = [
        ("b1", params["b1"], H1),        # 512
        ("g2", params["g2"], H2),        # 256
        ("be2", params["be2"], H2),      # 256
        ("g3", params["g3"], H3),        # 128
        ("be3", params["be3"], H3),      # 128
        ("g4", g4, H4_PAD),              # 128
        ("be4", be4, H4_PAD),            # 128
        ("b5", b5, out_pad),             # >= 128
    ]
    offsets, sizes, pieces, off = {}, {}, [], 0
    for name, arr, padded_n in segs:
        offsets[name] = off
        sizes[name] = padded_n
        pieces.append(jnp.pad(arr, ((0, 0), (0, padded_n - arr.shape[1]))))
        off += padded_n
    vec = jnp.concatenate(pieces, axis=1)  # (1, off) f32, every segment 128-aligned

    args = (
        x.astype(jnp.bfloat16),          # halve the x DMA; MXU operand dtype anyway
        params["w1"], params["w2"], params["w3"], w4, w5,
        vec,
    )

    flops = 2 * B * (in_features * H1 + H1 * H2 + H2 * H3 + H3 * H4_PAD
                     + H4_PAD * out_pad)
    bytes_accessed = sum(int(a.size) * a.dtype.itemsize for a in args) \
        + B * out_pad * 4
    cost = pl.CostEstimate(
        flops=flops,
        transcendentals=H2 + H3 + H4_PAD,   # one rsqrt per BN feature
        bytes_accessed=bytes_accessed,
    )

    vmem_spec = pl.BlockSpec(memory_space=pltpu.VMEM)
    out = pl.pallas_call(
        _make_kernel(offsets, sizes),
        out_shape=jax.ShapeDtypeStruct((B, out_pad), jnp.float32),
        in_specs=[vmem_spec] * len(args),
        out_specs=vmem_spec,
        cost_estimate=cost,
    )(*args)
    return out[:, :output_features]


def network_ref(x, params):
    """Pure-JAX f32 reference (bf16-valued weights upcast to f32; includes the
    b2/b3/b4 biases, which cancel under training-mode BN)."""
    w = lambda k: params[k].astype(jnp.float32)
    h = jnp.maximum(x @ w("w1") + params["b1"], 0.0)
    for li in (2, 3, 4):
        z = h @ w(f"w{li}") + params[f"b{li}"]
        mean = jnp.mean(z, axis=0, keepdims=True)
        var = jnp.mean((z - mean) ** 2, axis=0, keepdims=True)
        z = params[f"g{li}"] * (z - mean) * jax.lax.rsqrt(var + EPS) + params[f"be{li}"]
        h = jnp.maximum(z, 0.0)
    return jnp.maximum(h @ w("w5") + params["b5"], 0.0)


if __name__ == "__main__":
    input_features = 32
    output_features = 16
    batch = 8

    key = jax.random.PRNGKey(0)
    kx, kp = jax.random.split(key)
    x = jax.random.normal(kx, (batch, input_features), jnp.float32)
    params = init_params(kp, input_features, output_features)

    forward = jax.jit(functools.partial(network_forward,
                                        output_features=output_features))
    out = forward(x, params)
    out = jax.block_until_ready(out)

    ref = network_ref(x, params)
    assert out.shape == (batch, output_features)
    # bf16 matmul operands (f32 accumulate) vs. f32 reference -> loosened tol.
    assert jnp.allclose(out, ref, atol=3e-2, rtol=3e-2), "mismatch vs JAX reference"

    print("KERNEL_OK")
</pallas_src>

<mosaic_0001>
module attributes {stable_mosaic.version = 11 : i64} {
  func.func @mlp_kernel(%arg0: memref<8x32xbf16, #tpu.memory_space<vmem>>, %arg1: memref<32x512xbf16, #tpu.memory_space<vmem>>, %arg2: memref<512x256xbf16, #tpu.memory_space<vmem>>, %arg3: memref<256x128xbf16, #tpu.memory_space<vmem>>, %arg4: memref<128x128xbf16, #tpu.memory_space<vmem>>, %arg5: memref<128x128xbf16, #tpu.memory_space<vmem>>, %arg6: memref<1x1664xf32, #tpu.memory_space<vmem>>, %arg7: memref<8x128xf32, #tpu.memory_space<vmem>>) attributes {dimension_semantics = [], scalar_prefetch = 0 : i64, scratch_operands = 0 : i64, tpu.core_type = #tpu.core_type<tc>} {
    %c0 = arith.constant 0 : index
    %c0_0 = arith.constant 0 : index
    %0 = vector.load %arg0[%c0, %c0_0] : memref<8x32xbf16, #tpu.memory_space<vmem>>, vector<8x32xbf16>
    %c0_1 = arith.constant 0 : index
    %c0_2 = arith.constant 0 : index
    %1 = vector.load %arg1[%c0_1, %c0_2] : memref<32x512xbf16, #tpu.memory_space<vmem>>, vector<32x512xbf16>
    %cst = arith.constant dense<0.000000e+00> : vector<8x512xf32>
    %2 = tpu.matmul %0, %1, %cst {dimension_numbers = #tpu.dot_dimension_numbers<[1], [0], [0], [1], [0, 0, 1, 1], [], []>} : vector<8x32xbf16>, vector<32x512xbf16>, vector<8x512xf32> -> vector<8x512xf32>
    %c0_3 = arith.constant 0 : index
    %c0_4 = arith.constant 0 : index
    %3 = vector.load %arg6[%c0_3, %c0_4] : memref<1x1664xf32, #tpu.memory_space<vmem>>, vector<1x512xf32>
    %4 = vector.broadcast %3 : vector<1x512xf32> to vector<8x512xf32>
    %5 = arith.addf %2, %4 : vector<8x512xf32>
    %cst_5 = arith.constant 0.000000e+00 : f32
    %6 = vector.broadcast %cst_5 : f32 to vector<8x512xf32>
    %7 = arith.maximumf %5, %6 : vector<8x512xf32>
    %8 = arith.truncf %7 : vector<8x512xf32> to vector<8x512xbf16>
    %c0_6 = arith.constant 0 : index
    %c0_7 = arith.constant 0 : index
    %9 = vector.load %arg2[%c0_6, %c0_7] : memref<512x256xbf16, #tpu.memory_space<vmem>>, vector<512x256xbf16>
    %cst_8 = arith.constant dense<0.000000e+00> : vector<8x256xf32>
    %10 = tpu.matmul %8, %9, %cst_8 {dimension_numbers = #tpu.dot_dimension_numbers<[1], [0], [0], [1], [0, 0, 1, 1], [], []>} : vector<8x512xbf16>, vector<512x256xbf16>, vector<8x256xf32> -> vector<8x256xf32>
    %c0_9 = arith.constant 0 : index
    %c512 = arith.constant 512 : index
    %11 = vector.load %arg6[%c0_9, %c512] : memref<1x1664xf32, #tpu.memory_space<vmem>>, vector<1x256xf32>
    %c0_10 = arith.constant 0 : index
    %c768 = arith.constant 768 : index
    %12 = vector.load %arg6[%c0_10, %c768] : memref<1x1664xf32, #tpu.memory_space<vmem>>, vector<1x256xf32>
    %cst_11 = arith.constant dense<0.000000e+00> : vector<256xf32>
    %13 = vector.multi_reduction <add>, %10, %cst_11 [0] : vector<8x256xf32> to vector<256xf32>
    %14 = vector.shape_cast %13 : vector<256xf32> to vector<1x256xf32>
    %cst_12 = arith.constant 8.000000e+00 : f32
    %15 = vector.broadcast %cst_12 : f32 to vector<1x256xf32>
    %16 = arith.divf %14, %15 : vector<1x256xf32>
    %17 = vector.broadcast %16 : vector<1x256xf32> to vector<8x256xf32>
    %18 = arith.subf %10, %17 : vector<8x256xf32>
    %19 = arith.mulf %18, %18 : vector<8x256xf32>
    %cst_13 = arith.constant dense<0.000000e+00> : vector<256xf32>
    %20 = vector.multi_reduction <add>, %19, %cst_13 [0] : vector<8x256xf32> to vector<256xf32>
    %21 = vector.shape_cast %20 : vector<256xf32> to vector<1x256xf32>
    %cst_14 = arith.constant 8.000000e+00 : f32
    %22 = vector.broadcast %cst_14 : f32 to vector<1x256xf32>
    %23 = arith.divf %21, %22 : vector<1x256xf32>
    %cst_15 = arith.constant 9.99999974E-6 : f32
    %24 = vector.broadcast %cst_15 : f32 to vector<1x256xf32>
    %25 = arith.addf %23, %24 : vector<1x256xf32>
    %26 = math.rsqrt %25 : vector<1x256xf32>
    %27 = arith.mulf %11, %26 : vector<1x256xf32>
    %28 = vector.broadcast %27 : vector<1x256xf32> to vector<8x256xf32>
    %29 = arith.mulf %18, %28 : vector<8x256xf32>
    %30 = vector.broadcast %12 : vector<1x256xf32> to vector<8x256xf32>
    %31 = arith.addf %29, %30 : vector<8x256xf32>
    %cst_16 = arith.constant 0.000000e+00 : f32
    %32 = vector.broadcast %cst_16 : f32 to vector<8x256xf32>
    %33 = arith.maximumf %31, %32 : vector<8x256xf32>
    %34 = arith.truncf %33 : vector<8x256xf32> to vector<8x256xbf16>
    %c0_17 = arith.constant 0 : index
    %c0_18 = arith.constant 0 : index
    %35 = vector.load %arg3[%c0_17, %c0_18] : memref<256x128xbf16, #tpu.memory_space<vmem>>, vector<256x128xbf16>
    %cst_19 = arith.constant dense<0.000000e+00> : vector<8x128xf32>
    %36 = tpu.matmul %34, %35, %cst_19 {dimension_numbers = #tpu.dot_dimension_numbers<[1], [0], [0], [1], [0, 0, 1, 1], [], []>} : vector<8x256xbf16>, vector<256x128xbf16>, vector<8x128xf32> -> vector<8x128xf32>
    %c0_20 = arith.constant 0 : index
    %c1024 = arith.constant 1024 : index
    %37 = vector.load %arg6[%c0_20, %c1024] : memref<1x1664xf32, #tpu.memory_space<vmem>>, vector<1x128xf32>
    %c0_21 = arith.constant 0 : index
    %c1152 = arith.constant 1152 : index
    %38 = vector.load %arg6[%c0_21, %c1152] : memref<1x1664xf32, #tpu.memory_space<vmem>>, vector<1x128xf32>
    %cst_22 = arith.constant dense<0.000000e+00> : vector<128xf32>
    %39 = vector.multi_reduction <add>, %36, %cst_22 [0] : vector<8x128xf32> to vector<128xf32>
    %40 = vector.shape_cast %39 : vector<128xf32> to vector<1x128xf32>
    %cst_23 = arith.constant 8.000000e+00 : f32
    %41 = vector.broadcast %cst_23 : f32 to vector<1x128xf32>
    %42 = arith.divf %40, %41 : vector<1x128xf32>
    %43 = vector.broadcast %42 : vector<1x128xf32> to vector<8x128xf32>
    %44 = arith.subf %36, %43 : vector<8x128xf32>
    %45 = arith.mulf %44, %44 : vector<8x128xf32>
    %cst_24 = arith.constant dense<0.000000e+00> : vector<128xf32>
    %46 = vector.multi_reduction <add>, %45, %cst_24 [0] : vector<8x128xf32> to vector<128xf32>
    %47 = vector.shape_cast %46 : vector<128xf32> to vector<1x128xf32>
    %cst_25 = arith.constant 8.000000e+00 : f32
    %48 = vector.broadcast %cst_25 : f32 to vector<1x128xf32>
    %49 = arith.divf %47, %48 : vector<1x128xf32>
    %cst_26 = arith.constant 9.99999974E-6 : f32
    %50 = vector.broadcast %cst_26 : f32 to vector<1x128xf32>
    %51 = arith.addf %49, %50 : vector<1x128xf32>
    %52 = math.rsqrt %51 : vector<1x128xf32>
    %53 = arith.mulf %37, %52 : vector<1x128xf32>
    %54 = vector.broadcast %53 : vector<1x128xf32> to vector<8x128xf32>
    %55 = arith.mulf %44, %54 : vector<8x128xf32>
    %56 = vector.broadcast %38 : vector<1x128xf32> to vector<8x128xf32>
    %57 = arith.addf %55, %56 : vector<8x128xf32>
    %cst_27 = arith.constant 0.000000e+00 : f32
    %58 = vector.broadcast %cst_27 : f32 to vector<8x128xf32>
    %59 = arith.maximumf %57, %58 : vector<8x128xf32>
    %60 = arith.truncf %59 : vector<8x128xf32> to vector<8x128xbf16>
    %c0_28 = arith.constant 0 : index
    %c0_29 = arith.constant 0 : index
    %61 = vector.load %arg4[%c0_28, %c0_29] : memref<128x128xbf16, #tpu.memory_space<vmem>>, vector<128x128xbf16>
    %cst_30 = arith.constant dense<0.000000e+00> : vector<8x128xf32>
    %62 = tpu.matmul %60, %61, %cst_30 {dimension_numbers = #tpu.dot_dimension_numbers<[1], [0], [0], [1], [0, 0, 1, 1], [], []>} : vector<8x128xbf16>, vector<128x128xbf16>, vector<8x128xf32> -> vector<8x128xf32>
    %c0_31 = arith.constant 0 : index
    %c1280 = arith.constant 1280 : index
    %63 = vector.load %arg6[%c0_31, %c1280] : memref<1x1664xf32, #tpu.memory_space<vmem>>, vector<1x128xf32>
    %c0_32 = arith.constant 0 : index
    %c1408 = arith.constant 1408 : index
    %64 = vector.load %arg6[%c0_32, %c1408] : memref<1x1664xf32, #tpu.memory_space<vmem>>, vector<1x128xf32>
    %cst_33 = arith.constant dense<0.000000e+00> : vector<128xf32>
    %65 = vector.multi_reduction <add>, %62, %cst_33 [0] : vector<8x128xf32> to vector<128xf32>
    %66 = vector.shape_cast %65 : vector<128xf32> to vector<1x128xf32>
    %cst_34 = arith.constant 8.000000e+00 : f32
    %67 = vector.broadcast %cst_34 : f32 to vector<1x128xf32>
    %68 = arith.divf %66, %67 : vector<1x128xf32>
    %69 = vector.broadcast %68 : vector<1x128xf32> to vector<8x128xf32>
    %70 = arith.subf %62, %69 : vector<8x128xf32>
    %71 = arith.mulf %70, %70 : vector<8x128xf32>
    %cst_35 = arith.constant dense<0.000000e+00> : vector<128xf32>
    %72 = vector.multi_reduction <add>, %71, %cst_35 [0] : vector<8x128xf32> to vector<128xf32>
    %73 = vector.shape_cast %72 : vector<128xf32> to vector<1x128xf32>
    %cst_36 = arith.constant 8.000000e+00 : f32
    %74 = vector.broadcast %cst_36 : f32 to vector<1x128xf32>
    %75 = arith.divf %73, %74 : vector<1x128xf32>
    %cst_37 = arith.constant 9.99999974E-6 : f32
    %76 = vector.broadcast %cst_37 : f32 to vector<1x128xf32>
    %77 = arith.addf %75, %76 : vector<1x128xf32>
    %78 = math.rsqrt %77 : vector<1x128xf32>
    %79 = arith.mulf %63, %78 : vector<1x128xf32>
    %80 = vector.broadcast %79 : vector<1x128xf32> to vector<8x128xf32>
    %81 = arith.mulf %70, %80 : vector<8x128xf32>
    %82 = vector.broadcast %64 : vector<1x128xf32> to vector<8x128xf32>
    %83 = arith.addf %81, %82 : vector<8x128xf32>
    %cst_38 = arith.constant 0.000000e+00 : f32
    %84 = vector.broadcast %cst_38 : f32 to vector<8x128xf32>
    %85 = arith.maximumf %83, %84 : vector<8x128xf32>
    %86 = arith.truncf %85 : vector<8x128xf32> to vector<8x128xbf16>
    %c0_39 = arith.constant 0 : index
    %c0_40 = arith.constant 0 : index
    %87 = vector.load %arg5[%c0_39, %c0_40] : memref<128x128xbf16, #tpu.memory_space<vmem>>, vector<128x128xbf16>
    %cst_41 = arith.constant dense<0.000000e+00> : vector<8x128xf32>
    %88 = tpu.matmul %86, %87, %cst_41 {dimension_numbers = #tpu.dot_dimension_numbers<[1], [0], [0], [1], [0, 0, 1, 1], [], []>} : vector<8x128xbf16>, vector<128x128xbf16>, vector<8x128xf32> -> vector<8x128xf32>
    %c0_42 = arith.constant 0 : index
    %c1536 = arith.constant 1536 : index
    %89 = vector.load %arg6[%c0_42, %c1536] : memref<1x1664xf32, #tpu.memory_space<vmem>>, vector<1x128xf32>
    %90 = vector.broadcast %89 : vector<1x128xf32> to vector<8x128xf32>
    %91 = arith.addf %88, %90 : vector<8x128xf32>
    %cst_43 = arith.constant 0.000000e+00 : f32
    %92 = vector.broadcast %cst_43 : f32 to vector<8x128xf32>
    %93 = arith.maximumf %91, %92 : vector<8x128xf32>
    %c0_44 = arith.constant 0 : index
    %c0_45 = arith.constant 0 : index
    %94 = vector.load %arg7[%c0_44, %c0_45] : memref<8x128xf32, #tpu.memory_space<vmem>>, vector<8x128xf32>
    tpu.vector_store %arg7[%c0_44, %c0_45], %93 {strides = array<i32>} : memref<8x128xf32, #tpu.memory_space<vmem>>, vector<8x128xf32>,
    return
  }
}

</mosaic_0001>

<llo_original>
// kernel: network_forward.1
$region0: #{network_forward.1}
  #allocation0 [shape = 'u32[]', space=smem, size = 0x4, offset = 0x4, fixed_abs, tag = 'smem constant byte address 0x4 - core index']
  #allocation1 [shape = 'u32[144,128]{1,0:T(1,128)}', space=vmem, size = 0x12000, scoped, tag = 'internal scratch']
  %s0 = inlined_call_operand.vmem [shape: bf16[8,32], index: 0, kind: input, shape index: {}]
  %s1 = inlined_call_operand.vmem [shape: bf16[32,512], index: 1, kind: input, shape index: {}]
  %s2 = inlined_call_operand.hbm [shape: bf16[512,256], index: 2, kind: input, shape index: {}]
  %s3 = inlined_call_operand.vmem [shape: bf16[256,128], index: 3, kind: input, shape index: {}]
  %s4 = inlined_call_operand.vmem [shape: bf16[128,128], index: 4, kind: input, shape index: {}]
  %s5 = inlined_call_operand.vmem [shape: bf16[128,128], index: 5, kind: input, shape index: {}]
  %s6 = inlined_call_operand.vmem [shape: f32[1,1664], index: 6, kind: input, shape index: {}]
  %s7 = inlined_call_operand.hbm [shape: f32[8,128], index: 7, kind: output, shape index: {}]
  %s8 = sld [smem:[#allocation0]]
  $region42: #{network_forward.1} parent=0
    _
  %s10 = ssub.s32 1, %s8
  %s11 = scalar_select 0, %s10, %s8
  $region1: #{network_forward.1} parent=0
    #allocation2 [shape = 'u8[262144]{0}', space=vmem, size = 0x40000, scoped, tag = 'input window, operand 2, single buffered']
    #allocation3 [shape = 's32[1]{0}', space=sflag, size = 0x4, scoped, tag = 'scoped memory for network_forward.1']
    #allocation4 [shape = 's32[1]{0}', space=sflag, size = 0x4, scoped, tag = 'scoped memory for network_forward.1']
    #allocation5 [shape = 'u8[4096]{0}', space=vmem, size = 0x1000, scoped, tag = 'output window, operand 0, single buffered']
    %12 = vsyncpa [#allocation3], 0
    %13 = vsyncpa [#allocation4], 0
    // Predicated region
    $region2: #{network_forward.1} parent=1 // pred_check
      _
    $region3: #{network_forward.1} parent=1 // pred_check_branch
      %15 = sbr.rel (0) target = $region5
    $region4: #{network_forward.1} parent=1 // pred_region
      _
    $region5: #{network_forward.1} parent=1 // pred_fallthru
      _
    // Predicated region
    $region6: #{network_forward.1} parent=1 // pred_check
      _
    $region7: #{network_forward.1} parent=1 // pred_check_branch
      %17 = sbr.rel (0) target = $region9
    $region8: #{network_forward.1} parent=1 // pred_region
      _
    $region9: #{network_forward.1} parent=1 // pred_fallthru
      _
    // Predicated region
    $region10: #{network_forward.1} parent=1 // pred_check
      _
    $region11: #{network_forward.1} parent=1 // pred_check_branch
      %19 = sbr.rel (0) target = $region13
    $region12: #{network_forward.1} parent=1 // pred_region
      %s21 = ssub.s32 8192, 8192
      %22 = vsyncadd [#allocation3], %s21
      %s23 = sshll.u32 [#allocation2], 4
      %s24 = int_to_ptr.vmem [resolvable:$true] %s23
      %29 = dma.hbm_to_vmem [thread:$0]  %s2, 8192, %s24, [#allocation3], 128, 128, 8
    $region13: #{network_forward.1} parent=1 // pred_fallthru
      _
    // Predicated region
    $region14: #{network_forward.1} parent=1 // pred_check
      _
    $region15: #{network_forward.1} parent=1 // pred_check_branch
      %31 = sbr.rel (0) target = $region17
    $region16: #{network_forward.1} parent=1 // pred_region
      _
    $region17: #{network_forward.1} parent=1 // pred_fallthru
      _
    // Predicated region
    $region18: #{network_forward.1} parent=1 // pred_check
      _
    $region19: #{network_forward.1} parent=1 // pred_check_branch
      %33 = sbr.rel (0) target = $region21
    $region20: #{network_forward.1} parent=1 // pred_region
      _
    $region21: #{network_forward.1} parent=1 // pred_fallthru
      _
    // Predicated region
    $region22: #{network_forward.1} parent=1 // pred_check
      _
    $region23: #{network_forward.1} parent=1 // pred_check_branch
      %35 = sbr.rel (0) target = $region25
    $region24: #{network_forward.1} parent=1 // pred_region
      _
    $region25: #{network_forward.1} parent=1 // pred_fallthru
      _
    // Predicated region
    $region26: #{network_forward.1} parent=1 // pred_check
      _
    $region27: #{network_forward.1} parent=1 // pred_check_branch
      %37 = sbr.rel (0) target = $region29
    $region28: #{network_forward.1} parent=1 // pred_region
      _
    $region29: #{network_forward.1} parent=1 // pred_fallthru
      _
    // Predicated region
    $region30: #{network_forward.1} parent=1 // pred_check
      _
    $region31: #{network_forward.1} parent=1 // pred_check_branch
      %39 = sbr.rel (0) target = $region33
    $region32: #{network_forward.1} parent=1 // pred_region
      %40 = dma.done [#allocation3], 8192
    $region33: #{network_forward.1} parent=1 // pred_fallthru
      _
    %v42 = vld [vmem:[%s0] sm:$0xf]
    %v43 = vld [vmem:[%s1] sm:$0xff]
    %v44 = vld [vmem:[%s1 + $0x8] sm:$0xff]
    %v45 = vld [vmem:[%s1 + $0x10] sm:$0xff]
    %v46 = vld [vmem:[%s1 + $0x18] sm:$0xff]
    %v47 = vld [vmem:[%s1 + $0x20] sm:$0xff]
    %v48 = vld [vmem:[%s1 + $0x28] sm:$0xff]
    %v49 = vld [vmem:[%s1 + $0x30] sm:$0xff]
    %v50 = vld [vmem:[%s1 + $0x38] sm:$0xff]
    %v51 = vld [vmem:[%s6] sm:$0xf]
    %v53 = vlaneseq
    %v54 = vshrl.u32 %v53, 7
    %v55 = vsub.s32 0, %v54
    %v56 = vrot.slane %v51, %v55
    %v57 = vlaneseq
    %v58 = vshrl.u32 %v57, 7
    %v59 = vsub.s32 1, %v58
    %v60 = vrot.slane %v51, %v59
    %v61 = vlaneseq
    %v62 = vshrl.u32 %v61, 7
    %v63 = vsub.s32 2, %v62
    %v64 = vrot.slane %v51, %v63
    %v65 = vlaneseq
    %v66 = vshrl.u32 %v65, 7
    %v67 = vsub.s32 3, %v66
    %v68 = vrot.slane %v51, %v67
    %v81 = vunpack.c.l.b16 %v43
    %v82 = vunpack.c.h.b16 %v43
    %v83 = vunpack.c.l.b16 %v44
    %v84 = vunpack.c.h.b16 %v44
    %v85 = vunpack.c.l.b16 %v45
    %v86 = vunpack.c.h.b16 %v45
    %v87 = vunpack.c.l.b16 %v46
    %v88 = vunpack.c.h.b16 %v46
    %v89 = vunpack.c.l.b16 %v47
    %v90 = vunpack.c.h.b16 %v47
    %v91 = vunpack.c.l.b16 %v48
    %v92 = vunpack.c.h.b16 %v48
    %v93 = vunpack.c.l.b16 %v49
    %v94 = vunpack.c.h.b16 %v49
    %v95 = vunpack.c.l.b16 %v50
    %v96 = vunpack.c.h.b16 %v50
    %v97 = vpack.c.b16 %v85, %v81
    %v98 = vpack.c.b16 %v86, %v82
    %v99 = vpack.c.b16 %v87, %v83
    %v100 = vpack.c.b16 %v88, %v84
    %v101 = vpack.c.b16 %v93, %v89
    %v102 = vpack.c.b16 %v94, %v90
    %v103 = vpack.c.b16 %v95, %v91
    %v104 = vpack.c.b16 %v96, %v92
    %vm113 = vcmask 261120
    %v115 = vsel %vm113, %v42, 0
    %117 = vmatprep.subr.bf16.mxu0 %v98
    %118 = vmatpush1.bf16.msra.mxu0 %v97
    %119 = vmatprep.subr.bf16.mxu0 %v102
    %120 = vmatpush1.bf16.msra.mxu0 %v101
    %121 = vmatprep.subr.bf16.mxu0 0
    %122 = vmatpush1.bf16.msra.mxu0 0
    %123 = vmatprep.subr.bf16.mxu0 0
    %124 = vmatpush1.bf16.msra.mxu0 0
    %125 = vmatprep.subr.bf16.mxu0 0
    %126 = vmatpush1.bf16.msra.mxu0 0
    %127 = vmatprep.subr.bf16.mxu0 0
    %128 = vmatpush1.bf16.msra.mxu0 0
    %129 = vmatprep.subr.bf16.mxu0 0
    %130 = vmatpush1.bf16.msra.mxu0 0
    %131 = vmatprep.subr.bf16.mxu0 0
    %132 = vmatpush1.bf16.msra.mxu0 0
    %133 = vmatprep.subr.bf16.mxu0 0
    %134 = vmatpush1.bf16.msra.mxu0 0
    %135 = vmatprep.subr.bf16.mxu0 0
    %136 = vmatpush1.bf16.msra.mxu0 0
    %137 = vmatprep.subr.bf16.mxu0 0
    %138 = vmatpush1.bf16.msra.mxu0 0
    %139 = vmatprep.subr.bf16.mxu0 0
    %140 = vmatpush1.bf16.msra.mxu0 0
    %141 = vmatprep.subr.bf16.mxu0 0
    %142 = vmatpush1.bf16.msra.mxu0 0
    %143 = vmatprep.subr.bf16.mxu0 0
    %144 = vmatpush1.bf16.msra.mxu0 0
    %145 = vmatprep.subr.bf16.mxu0 0
    %146 = vmatpush1.bf16.msra.mxu0 0
    %147 = vmatprep.subr.bf16.mxu0 0
    %148 = vmatpush1.bf16.msra.mxu0 0
    %149 = vmatprep.mubr.bf16.mxu0 0
    %150 = vmatmul.mubr.bf16.gmra.mrb[0].mxu0 %v115
    %v151 = vpop.f32.mrb[0].mxu0
    %v152 = vadd.f32 %v56, %v151
    %v153 = vpop.f32.mrb[0].mxu0
    %v154 = vadd.f32 %v60, %v153
    %v155 = vpop.f32.mrb[0].mxu0
    %v156 = vpop.f32.mrb[0].mxu0
    %157 = vdwg.mxu0
    %158 = vmatprep.subr.bf16.mxu0 %v100
    %159 = vmatpush1.bf16.msra.mxu0 %v99
    %160 = vmatprep.subr.bf16.mxu0 %v104
    %161 = vmatpush1.bf16.msra.mxu0 %v103
    %162 = vmatprep.subr.bf16.mxu0 0
    %163 = vmatpush1.bf16.msra.mxu0 0
    %164 = vmatprep.subr.bf16.mxu0 0
    %165 = vmatpush1.bf16.msra.mxu0 0
    %166 = vmatprep.subr.bf16.mxu0 0
    %167 = vmatpush1.bf16.msra.mxu0 0
    %168 = vmatprep.subr.bf16.mxu0 0
    %169 = vmatpush1.bf16.msra.mxu0 0
    %170 = vmatprep.subr.bf16.mxu0 0
    %171 = vmatpush1.bf16.msra.mxu0 0
    %172 = vmatprep.subr.bf16.mxu0 0
    %173 = vmatpush1.bf16.msra.mxu0 0
    %174 = vmatprep.subr.bf16.mxu0 0
    %175 = vmatpush1.bf16.msra.mxu0 0
    %176 = vmatprep.subr.bf16.mxu0 0
    %177 = vmatpush1.bf16.msra.mxu0 0
    %178 = vmatprep.subr.bf16.mxu0 0
    %179 = vmatpush1.bf16.msra.mxu0 0
    %180 = vmatprep.subr.bf16.mxu0 0
    %181 = vmatpush1.bf16.msra.mxu0 0
    %182 = vmatprep.subr.bf16.mxu0 0
    %183 = vmatpush1.bf16.msra.mxu0 0
    %184 = vmatprep.subr.bf16.mxu0 0
    %185 = vmatpush1.bf16.msra.mxu0 0
    %186 = vmatprep.subr.bf16.mxu0 0
    %187 = vmatpush1.bf16.msra.mxu0 0
    %188 = vmatprep.subr.bf16.mxu0 0
    %189 = vmatpush1.bf16.msra.mxu0 0
    %190 = vmatprep.mubr.bf16.mxu0 0
    %191 = vmatmul.mubr.bf16.gmra.mrb[0].mxu0 %v115
    %v192 = vpop.f32.mrb[0].mxu0
    %v193 = vadd.f32 %v64, %v192
    %v194 = vpop.f32.mrb[0].mxu0
    %v195 = vadd.f32 %v68, %v194
    %v196 = vpop.f32.mrb[0].mxu0
    %v197 = vpop.f32.mrb[0].mxu0
    %198 = vdwg.mxu0
    %v199 = vmax.f32 %v152, 0.0
    %v200 = vmax.f32 %v154, 0.0
    %v201 = vmax.f32 %v193, 0.0
    %v202 = vmax.f32 %v195, 0.0
    %v203 = vpack.c.bf16 %v199, %v199
    %v204 = vpack.c.bf16 %v200, %v200
    %v205 = vpack.c.bf16 %v201, %v201
    %v206 = vpack.c.bf16 %v202, %v202
    %v207 = vld [vmem:[#allocation2] sm:$0xff]
    %v208 = vld [vmem:[#allocation2 + $0x8] sm:$0xff]
    %v209 = vld [vmem:[#allocation2 + $0x10] sm:$0xff]
    %v210 = vld [vmem:[#allocation2 + $0x18] sm:$0xff]
    %v211 = vld [vmem:[#allocation2 + $0x20] sm:$0xff]
    %v212 = vld [vmem:[#allocation2 + $0x28] sm:$0xff]
    %v213 = vld [vmem:[#allocation2 + $0x30] sm:$0xff]
    %v214 = vld [vmem:[#allocation2 + $0x38] sm:$0xff]
    %v215 = vld [vmem:[#allocation2 + $0x40] sm:$0xff]
    %v216 = vld [vmem:[#allocation2 + $0x48] sm:$0xff]
    %v217 = vld [vmem:[#allocation2 + $0x50] sm:$0xff]
    %v218 = vld [vmem:[#allocation2 + $0x58] sm:$0xff]
    %v219 = vld [vmem:[#allocation2 + $0x60] sm:$0xff]
    %v220 = vld [vmem:[#allocation2 + $0x68] sm:$0xff]
    %v221 = vld [vmem:[#allocation2 + $0x70] sm:$0xff]
    %v222 = vld [vmem:[#allocation2 + $0x78] sm:$0xff]
    %v223 = vld [vmem:[#allocation2 + $0x80] sm:$0xff]
    %v224 = vld [vmem:[#allocation2 + $0x88] sm:$0xff]
    %v225 = vld [vmem:[#allocation2 + $0x90] sm:$0xff]
    %v226 = vld [vmem:[#allocation2 + $0x98] sm:$0xff]
    %v227 = vld [vmem:[#allocation2 + $0xa0] sm:$0xff]
    %v228 = vld [vmem:[#allocation2 + $0xa8] sm:$0xff]
    %v229 = vld [vmem:[#allocation2 + $0xb0] sm:$0xff]
    %v230 = vld [vmem:[#allocation2 + $0xb8] sm:$0xff]
    %v231 = vld [vmem:[#allocation2 + $0xc0] sm:$0xff]
    %v232 = vld [vmem:[#allocation2 + $0xc8] sm:$0xff]
    %v233 = vld [vmem:[#allocation2 + $0xd0] sm:$0xff]
    %v234 = vld [vmem:[#allocation2 + $0xd8] sm:$0xff]
    %v235 = vld [vmem:[#allocation2 + $0xe0] sm:$0xff]
    %v236 = vld [vmem:[#allocation2 + $0xe8] sm:$0xff]
    %v237 = vld [vmem:[#allocation2 + $0xf0] sm:$0xff]
    %v238 = vld [vmem:[#allocation2 + $0xf8] sm:$0xff]
    %v239 = vld [vmem:[#allocation2 + $0x100] sm:$0xff]
    %v240 = vld [vmem:[#allocation2 + $0x108] sm:$0xff]
    %v241 = vld [vmem:[#allocation2 + $0x110] sm:$0xff]
    %v242 = vld [vmem:[#allocation2 + $0x118] sm:$0xff]
    %v243 = vld [vmem:[#allocation2 + $0x120] sm:$0xff]
    %v244 = vld [vmem:[#allocation2 + $0x128] sm:$0xff]
    %v245 = vld [vmem:[#allocation2 + $0x130] sm:$0xff]
    %v246 = vld [vmem:[#allocation2 + $0x138] sm:$0xff]
    %v247 = vld [vmem:[#allocation2 + $0x140] sm:$0xff]
    %v248 = vld [vmem:[#allocation2 + $0x148] sm:$0xff]
    %v249 = vld [vmem:[#allocation2 + $0x150] sm:$0xff]
    %v250 = vld [vmem:[#allocation2 + $0x158] sm:$0xff]
    %v251 = vld [vmem:[#allocation2 + $0x160] sm:$0xff]
    %v252 = vld [vmem:[#allocation2 + $0x168] sm:$0xff]
    %v253 = vld [vmem:[#allocation2 + $0x170] sm:$0xff]
    %v254 = vld [vmem:[#allocation2 + $0x178] sm:$0xff]
    %v255 = vld [vmem:[#allocation2 + $0x180] sm:$0xff]
    %v256 = vld [vmem:[#allocation2 + $0x188] sm:$0xff]
    %v257 = vld [vmem:[#allocation2 + $0x190] sm:$0xff]
    %v258 = vld [vmem:[#allocation2 + $0x198] sm:$0xff]
    %v259 = vld [vmem:[#allocation2 + $0x1a0] sm:$0xff]
    %v260 = vld [vmem:[#allocation2 + $0x1a8] sm:$0xff]
    %v261 = vld [vmem:[#allocation2 + $0x1b0] sm:$0xff]
    %v262 = vld [vmem:[#allocation2 + $0x1b8] sm:$0xff]
    %v263 = vld [vmem:[#allocation2 + $0x1c0] sm:$0xff]
    %v264 = vld [vmem:[#allocation2 + $0x1c8] sm:$0xff]
    %v265 = vld [vmem:[#allocation2 + $0x1d0] sm:$0xff]
    %v266 = vld [vmem:[#allocation2 + $0x1d8] sm:$0xff]
    %v267 = vld [vmem:[#allocation2 + $0x1e0] sm:$0xff]
    %v268 = vld [vmem:[#allocation2 + $0x1e8] sm:$0xff]
    %v269 = vld [vmem:[#allocation2 + $0x1f0] sm:$0xff]
    %v270 = vld [vmem:[#allocation2 + $0x1f8] sm:$0xff]
    %v335 = vunpack.c.l.b16 %v207
    %v336 = vunpack.c.h.b16 %v207
    %v337 = vunpack.c.l.b16 %v208
    %v338 = vunpack.c.h.b16 %v208
    %v339 = vunpack.c.l.b16 %v209
    %v340 = vunpack.c.h.b16 %v209
    %v341 = vunpack.c.l.b16 %v210
    %v342 = vunpack.c.h.b16 %v210
    %v343 = vunpack.c.l.b16 %v211
    %v344 = vunpack.c.h.b16 %v211
    %v345 = vunpack.c.l.b16 %v212
    %v346 = vunpack.c.h.b16 %v212
    %v347 = vunpack.c.l.b16 %v213
    %v348 = vunpack.c.h.b16 %v213
    %v349 = vunpack.c.l.b16 %v214
    %v350 = vunpack.c.h.b16 %v214
    %v351 = vunpack.c.l.b16 %v215
    %v352 = vunpack.c.h.b16 %v215
    %v353 = vunpack.c.l.b16 %v216
    %v354 = vunpack.c.h.b16 %v216
    %v355 = vunpack.c.l.b16 %v217
    %v356 = vunpack.c.h.b16 %v217
    %v357 = vunpack.c.l.b16 %v218
    %v358 = vunpack.c.h.b16 %v218
    %v359 = vunpack.c.l.b16 %v219
    %v360 = vunpack.c.h.b16 %v219
    %v361 = vunpack.c.l.b16 %v220
    %v362 = vunpack.c.h.b16 %v220
    %v363 = vunpack.c.l.b16 %v221
    %v364 = vunpack.c.h.b16 %v221
    %v365 = vunpack.c.l.b16 %v222
    %v366 = vunpack.c.h.b16 %v222
    %v367 = vunpack.c.l.b16 %v223
    %v368 = vunpack.c.h.b16 %v223
    %v369 = vunpack.c.l.b16 %v224
    %v370 = vunpack.c.h.b16 %v224
    %v371 = vunpack.c.l.b16 %v225
    %v372 = vunpack.c.h.b16 %v225
    %v373 = vunpack.c.l.b16 %v226
    %v374 = vunpack.c.h.b16 %v226
    %v375 = vunpack.c.l.b16 %v227
    %v376 = vunpack.c.h.b16 %v227
    %v377 = vunpack.c.l.b16 %v228
    %v378 = vunpack.c.h.b16 %v228
    %v379 = vunpack.c.l.b16 %v229
    %v380 = vunpack.c.h.b16 %v229
    %v381 = vunpack.c.l.b16 %v230
    %v382 = vunpack.c.h.b16 %v230
    %v383 = vunpack.c.l.b16 %v231
    %v384 = vunpack.c.h.b16 %v231
    %v385 = vunpack.c.l.b16 %v232
    %v386 = vunpack.c.h.b16 %v232
    %v387 = vunpack.c.l.b16 %v233
    %v388 = vunpack.c.h.b16 %v233
    %v389 = vunpack.c.l.b16 %v234
    %v390 = vunpack.c.h.b16 %v234
    %v391 = vunpack.c.l.b16 %v235
    %v392 = vunpack.c.h.b16 %v235
    %v393 = vunpack.c.l.b16 %v236
    %v394 = vunpack.c.h.b16 %v236
    %v395 = vunpack.c.l.b16 %v237
    %v396 = vunpack.c.h.b16 %v237
    %v397 = vunpack.c.l.b16 %v238
    %v398 = vunpack.c.h.b16 %v238
    %v399 = vunpack.c.l.b16 %v239
    %v400 = vunpack.c.h.b16 %v239
    %v401 = vunpack.c.l.b16 %v240
    %v402 = vunpack.c.h.b16 %v240
    %v403 = vunpack.c.l.b16 %v241
    %v404 = vunpack.c.h.b16 %v241
    %v405 = vunpack.c.l.b16 %v242
    %v406 = vunpack.c.h.b16 %v242
    %v407 = vunpack.c.l.b16 %v243
    %v408 = vunpack.c.h.b16 %v243
    %v409 = vunpack.c.l.b16 %v244
    %v410 = vunpack.c.h.b16 %v244
    %v411 = vunpack.c.l.b16 %v245
    %v412 = vunpack.c.h.b16 %v245
    %v413 = vunpack.c.l.b16 %v246
    %v414 = vunpack.c.h.b16 %v246
    %v415 = vunpack.c.l.b16 %v247
    %v416 = vunpack.c.h.b16 %v247
    %v417 = vunpack.c.l.b16 %v248
    %v418 = vunpack.c.h.b16 %v248
    %v419 = vunpack.c.l.b16 %v249
    %v420 = vunpack.c.h.b16 %v249
    %v421 = vunpack.c.l.b16 %v250
    %v422 = vunpack.c.h.b16 %v250
    %v423 = vunpack.c.l.b16 %v251
    %v424 = vunpack.c.h.b16 %v251
    %v425 = vunpack.c.l.b16 %v252
    %v426 = vunpack.c.h.b16 %v252
    %v427 = vunpack.c.l.b16 %v253
    %v428 = vunpack.c.h.b16 %v253
    %v429 = vunpack.c.l.b16 %v254
    %v430 = vunpack.c.h.b16 %v254
    %v431 = vunpack.c.l.b16 %v255
    %v432 = vunpack.c.h.b16 %v255
    %v433 = vunpack.c.l.b16 %v256
    %v434 = vunpack.c.h.b16 %v256
    %v435 = vunpack.c.l.b16 %v257
    %v436 = vunpack.c.h.b16 %v257
    %v437 = vunpack.c.l.b16 %v258
    %v438 = vunpack.c.h.b16 %v258
    %v439 = vunpack.c.l.b16 %v259
    %v440 = vunpack.c.h.b16 %v259
    %v441 = vunpack.c.l.b16 %v260
    %v442 = vunpack.c.h.b16 %v260
    %v443 = vunpack.c.l.b16 %v261
    %v444 = vunpack.c.h.b16 %v261
    %v445 = vunpack.c.l.b16 %v262
    %v446 = vunpack.c.h.b16 %v262
    %v447 = vunpack.c.l.b16 %v263
    %v448 = vunpack.c.h.b16 %v263
    %v449 = vunpack.c.l.b16 %v264
    %v450 = vunpack.c.h.b16 %v264
    %v451 = vunpack.c.l.b16 %v265
    %v452 = vunpack.c.h.b16 %v265
    %v453 = vunpack.c.l.b16 %v266
    %v454 = vunpack.c.h.b16 %v266
    %v455 = vunpack.c.l.b16 %v267
    %v456 = vunpack.c.h.b16 %v267
    %v457 = vunpack.c.l.b16 %v268
    %v458 = vunpack.c.h.b16 %v268
    %v459 = vunpack.c.l.b16 %v269
    %v460 = vunpack.c.h.b16 %v269
    %v461 = vunpack.c.l.b16 %v270
    %v462 = vunpack.c.h.b16 %v270
    %v463 = vpack.c.b16 %v337, %v335
    %v464 = vpack.c.b16 %v338, %v336
    %v465 = vpack.c.b16 %v341, %v339
    %v466 = vpack.c.b16 %v342, %v340
    %v467 = vpack.c.b16 %v345, %v343
    %v468 = vpack.c.b16 %v346, %v344
    %v469 = vpack.c.b16 %v349, %v347
    %v470 = vpack.c.b16 %v350, %v348
    %v471 = vpack.c.b16 %v353, %v351
    %v472 = vpack.c.b16 %v354, %v352
    %v473 = vpack.c.b16 %v357, %v355
    %v474 = vpack.c.b16 %v358, %v356
    %v475 = vpack.c.b16 %v361, %v359
    %v476 = vpack.c.b16 %v362, %v360
    %v477 = vpack.c.b16 %v365, %v363
    %v478 = vpack.c.b16 %v366, %v364
    %v479 = vpack.c.b16 %v369, %v367
    %v480 = vpack.c.b16 %v370, %v368
    %v481 = vpack.c.b16 %v373, %v371
    %v482 = vpack.c.b16 %v374, %v372
    %v483 = vpack.c.b16 %v377, %v375
    %v484 = vpack.c.b16 %v378, %v376
    %v485 = vpack.c.b16 %v381, %v379
    %v486 = vpack.c.b16 %v382, %v380
    %v487 = vpack.c.b16 %v385, %v383
    %v488 = vpack.c.b16 %v386, %v384
    %v489 = vpack.c.b16 %v389, %v387
    %v490 = vpack.c.b16 %v390, %v388
    %v491 = vpack.c.b16 %v393, %v391
    %v492 = vpack.c.b16 %v394, %v392
    %v493 = vpack.c.b16 %v397, %v395
    %v494 = vpack.c.b16 %v398, %v396
    %v495 = vpack.c.b16 %v401, %v399
    %v496 = vpack.c.b16 %v402, %v400
    %v497 = vpack.c.b16 %v405, %v403
    %v498 = vpack.c.b16 %v406, %v404
    %v499 = vpack.c.b16 %v409, %v407
    %v500 = vpack.c.b16 %v410, %v408
    %v501 = vpack.c.b16 %v413, %v411
    %v502 = vpack.c.b16 %v414, %v412
    %v503 = vpack.c.b16 %v417, %v415
    %v504 = vpack.c.b16 %v418, %v416
    %v505 = vpack.c.b16 %v421, %v419
    %v506 = vpack.c.b16 %v422, %v420
    %v507 = vpack.c.b16 %v425, %v423
    %v508 = vpack.c.b16 %v426, %v424
    %v509 = vpack.c.b16 %v429, %v427
    %v510 = vpack.c.b16 %v430, %v428
    %v511 = vpack.c.b16 %v433, %v431
    %v512 = vpack.c.b16 %v434, %v432
    %v513 = vpack.c.b16 %v437, %v435
    %v514 = vpack.c.b16 %v438, %v436
    %v515 = vpack.c.b16 %v441, %v439
    %v516 = vpack.c.b16 %v442, %v440
    %v517 = vpack.c.b16 %v445, %v443
    %v518 = vpack.c.b16 %v446, %v444
    %v519 = vpack.c.b16 %v449, %v447
    %v520 = vpack.c.b16 %v450, %v448
    %v521 = vpack.c.b16 %v453, %v451
    %v522 = vpack.c.b16 %v454, %v452
    %v523 = vpack.c.b16 %v457, %v455
    %v524 = vpack.c.b16 %v458, %v456
    %v525 = vpack.c.b16 %v461, %v459
    %v526 = vpack.c.b16 %v462, %v460
    %591 = vmatprep.subr.bf16.mxu0 %v464
    %592 = vmatpush1.bf16.msra.mxu0 %v463
    %593 = vmatprep.subr.bf16.mxu0 %v466
    %594 = vmatpush1.bf16.msra.mxu0 %v465
    %595 = vmatprep.subr.bf16.mxu0 %v468
    %596 = vmatpush1.bf16.msra.mxu0 %v467
    %597 = vmatprep.subr.bf16.mxu0 %v470
    %598 = vmatpush1.bf16.msra.mxu0 %v469
    %599 = vmatprep.subr.bf16.mxu0 %v472
    %600 = vmatpush1.bf16.msra.mxu0 %v471
    %601 = vmatprep.subr.bf16.mxu0 %v474
    %602 = vmatpush1.bf16.msra.mxu0 %v473
    %603 = vmatprep.subr.bf16.mxu0 %v476
    %604 = vmatpush1.bf16.msra.mxu0 %v475
    %605 = vmatprep.subr.bf16.mxu0 %v478
    %606 = vmatpush1.bf16.msra.mxu0 %v477
    %607 = vmatprep.subr.bf16.mxu0 %v480
    %608 = vmatpush1.bf16.msra.mxu0 %v479
    %609 = vmatprep.subr.bf16.mxu0 %v482
    %610 = vmatpush1.bf16.msra.mxu0 %v481
    %611 = vmatprep.subr.bf16.mxu0 %v484
    %612 = vmatpush1.bf16.msra.mxu0 %v483
    %613 = vmatprep.subr.bf16.mxu0 %v486
    %614 = vmatpush1.bf16.msra.mxu0 %v485
    %615 = vmatprep.subr.bf16.mxu0 %v488
    %616 = vmatpush1.bf16.msra.mxu0 %v487
    %617 = vmatprep.subr.bf16.mxu0 %v490
    %618 = vmatpush1.bf16.msra.mxu0 %v489
    %619 = vmatprep.subr.bf16.mxu0 %v492
    %620 = vmatpush1.bf16.msra.mxu0 %v491
    %621 = vmatprep.subr.bf16.mxu0 %v494
    %622 = vmatpush1.bf16.msra.mxu0 %v493
    %623 = vmatprep.mubr.bf16.mxu0 %v204
    %624 = vmatmul.mubr.bf16.gmra.mrb[0].mxu0 %v203
    %v625 = vpop.f32.mrb[0].mxu0
    %v626 = vadd.f32 0.0, %v625
    %v627 = vpop.f32.mrb[0].mxu0
    %v628 = vadd.f32 0.0, %v627
    %v629 = vpop.f32.mrb[0].mxu0
    %v630 = vpop.f32.mrb[0].mxu0
    %631 = vdwg.mxu0
    %632 = vmatprep.subr.bf16.mxu0 %v496
    %633 = vmatpush1.bf16.msra.mxu0 %v495
    %634 = vmatprep.subr.bf16.mxu0 %v498
    %635 = vmatpush1.bf16.msra.mxu0 %v497
    %636 = vmatprep.subr.bf16.mxu0 %v500
    %637 = vmatpush1.bf16.msra.mxu0 %v499
    %638 = vmatprep.subr.bf16.mxu0 %v502
    %639 = vmatpush1.bf16.msra.mxu0 %v501
    %640 = vmatprep.subr.bf16.mxu0 %v504
    %641 = vmatpush1.bf16.msra.mxu0 %v503
    %642 = vmatprep.subr.bf16.mxu0 %v506
    %643 = vmatpush1.bf16.msra.mxu0 %v505
    %644 = vmatprep.subr.bf16.mxu0 %v508
    %645 = vmatpush1.bf16.msra.mxu0 %v507
    %646 = vmatprep.subr.bf16.mxu0 %v510
    %647 = vmatpush1.bf16.msra.mxu0 %v509
    %648 = vmatprep.subr.bf16.mxu0 %v512
    %649 = vmatpush1.bf16.msra.mxu0 %v511
    %650 = vmatprep.subr.bf16.mxu0 %v514
    %651 = vmatpush1.bf16.msra.mxu0 %v513
    %652 = vmatprep.subr.bf16.mxu0 %v516
    %653 = vmatpush1.bf16.msra.mxu0 %v515
    %654 = vmatprep.subr.bf16.mxu0 %v518
    %655 = vmatpush1.bf16.msra.mxu0 %v517
    %656 = vmatprep.subr.bf16.mxu0 %v520
    %657 = vmatpush1.bf16.msra.mxu0 %v519
    %658 = vmatprep.subr.bf16.mxu0 %v522
    %659 = vmatpush1.bf16.msra.mxu0 %v521
    %660 = vmatprep.subr.bf16.mxu0 %v524
    %661 = vmatpush1.bf16.msra.mxu0 %v523
    %662 = vmatprep.subr.bf16.mxu0 %v526
    %663 = vmatpush1.bf16.msra.mxu0 %v525
    %664 = vmatprep.mubr.bf16.mxu0 %v206
    %665 = vmatmul.mubr.bf16.gmra.mrb[0].mxu0 %v205
    %v666 = vpop.f32.mrb[0].mxu0
    %v667 = vadd.f32 %v626, %v666
    %v668 = vpop.f32.mrb[0].mxu0
    %v669 = vadd.f32 %v628, %v668
    %v670 = vpop.f32.mrb[0].mxu0
    %v671 = vpop.f32.mrb[0].mxu0
    %672 = vdwg.mxu0
    %v673 = vld [vmem:[%s6 + $0x4] sm:$0x3]
    %v674 = vld [vmem:[%s6 + $0x6] sm:$0x3]
    %v675 = vrot.slane %v667, 4
    %v676 = vadd.f32 %v667, %v675
    %v677 = vrot.slane %v676, 2
    %v678 = vadd.f32 %v676, %v677
    %v679 = vrot.slane %v678, 1
    %v680 = vadd.f32 %v678, %v679
    %v681 = vrot.slane %v669, 4
    %v682 = vadd.f32 %v669, %v681
    %v683 = vrot.slane %v682, 2
    %v684 = vadd.f32 %v682, %v683
    %v685 = vrot.slane %v684, 1
    %v686 = vadd.f32 %v684, %v685
    %v687 = vrcp.pop 8.0
    %v688 = vmul.f32 %v680, %v687
    %v689 = vmul.f32 %v686, %v687
    %v690 = vsub.f32 %v667, %v688
    %v691 = vsub.f32 %v669, %v689
    %v692 = vmul.f32 %v690, %v690
    %v693 = vmul.f32 %v691, %v691
    %v694 = vrot.slane %v692, 4
    %v695 = vadd.f32 %v692, %v694
    %v696 = vrot.slane %v695, 2
    %v697 = vadd.f32 %v695, %v696
    %v698 = vrot.slane %v697, 1
    %v699 = vadd.f32 %v697, %v698
    %v700 = vrot.slane %v693, 4
    %v701 = vadd.f32 %v693, %v700
    %v702 = vrot.slane %v701, 2
    %v703 = vadd.f32 %v701, %v702
    %v704 = vrot.slane %v703, 1
    %v705 = vadd.f32 %v703, %v704
    %v706 = vmul.f32 %v699, %v687
    %v707 = vmul.f32 %v705, %v687
    %v708 = vadd.f32 %v706, 1e-05
    %v709 = vadd.f32 %v707, 1e-05
    %v710 = vrsqrt.pop %v708
    %v711 = vrsqrt.pop %v709
    %v714 = vcombine.low %v710, %v711
    %v716 = vunpack.c.l.s4 1966171168
    %v717 = vunpack.c.0.s8 %v716
    %v718 = vlaneseq
    %v719 = vshrl.u32 %v718, 7
    %v720 = vsub.s32 %v717, %v719
    %v721 = vrot.slane %v714, %v720
    %v723 = vunpack.c.l.s4 1966171168
    %v724 = vunpack.c.0.s8 %v723
    %v725 = vlaneseq
    %v726 = vshrl.u32 %v725, 7
    %v727 = vsub.s32 %v724, %v726
    %v728 = vrot.slane %v721, %v727
    %v730 = vmul.f32 %v673, %v728
    %v732 = vlaneseq
    %v733 = vshrl.u32 %v732, 7
    %v734 = vsub.s32 0, %v733
    %v735 = vrot.slane %v730, %v734
    %v736 = vlaneseq
    %v737 = vshrl.u32 %v736, 7
    %v738 = vsub.s32 1, %v737
    %v739 = vrot.slane %v730, %v738
    %v742 = vmul.f32 %v690, %v735
    %v743 = vmul.f32 %v691, %v739
    %v745 = vlaneseq
    %v746 = vshrl.u32 %v745, 7
    %v747 = vsub.s32 0, %v746
    %v748 = vrot.slane %v674, %v747
    %v749 = vlaneseq
    %v750 = vshrl.u32 %v749, 7
    %v751 = vsub.s32 1, %v750
    %v752 = vrot.slane %v674, %v751
    %v755 = vadd.f32 %v742, %v748
    %v756 = vadd.f32 %v743, %v752
    %v757 = vmax.f32 %v755, 0.0
    %v758 = vmax.f32 %v756, 0.0
    %v759 = vpack.c.bf16 %v757, %v757
    %v760 = vpack.c.bf16 %v758, %v758
    %v761 = vld [vmem:[%s3] sm:$0xf]
    %v762 = vld [vmem:[%s3 + $0x4] sm:$0xf]
    %v763 = vld [vmem:[%s3 + $0x8] sm:$0xf]
    %v764 = vld [vmem:[%s3 + $0xc] sm:$0xf]
    %v765 = vld [vmem:[%s3 + $0x10] sm:$0xf]
    %v766 = vld [vmem:[%s3 + $0x14] sm:$0xf]
    %v767 = vld [vmem:[%s3 + $0x18] sm:$0xf]
    %v768 = vld [vmem:[%s3 + $0x1c] sm:$0xf]
    %v769 = vld [vmem:[%s3 + $0x20] sm:$0xf]
    %v770 = vld [vmem:[%s3 + $0x24] sm:$0xf]
    %v771 = vld [vmem:[%s3 + $0x28] sm:$0xf]
    %v772 = vld [vmem:[%s3 + $0x2c] sm:$0xf]
    %v773 = vld [vmem:[%s3 + $0x30] sm:$0xf]
    %v774 = vld [vmem:[%s3 + $0x34] sm:$0xf]
    %v775 = vld [vmem:[%s3 + $0x38] sm:$0xf]
    %v776 = vld [vmem:[%s3 + $0x3c] sm:$0xf]
    %v777 = vld [vmem:[%s3 + $0x40] sm:$0xf]
    %v778 = vld [vmem:[%s3 + $0x44] sm:$0xf]
    %v779 = vld [vmem:[%s3 + $0x48] sm:$0xf]
    %v780 = vld [vmem:[%s3 + $0x4c] sm:$0xf]
    %v781 = vld [vmem:[%s3 + $0x50] sm:$0xf]
    %v782 = vld [vmem:[%s3 + $0x54] sm:$0xf]
    %v783 = vld [vmem:[%s3 + $0x58] sm:$0xf]
    %v784 = vld [vmem:[%s3 + $0x5c] sm:$0xf]
    %v785 = vld [vmem:[%s3 + $0x60] sm:$0xf]
    %v786 = vld [vmem:[%s3 + $0x64] sm:$0xf]
    %v787 = vld [vmem:[%s3 + $0x68] sm:$0xf]
    %v788 = vld [vmem:[%s3 + $0x6c] sm:$0xf]
    %v789 = vld [vmem:[%s3 + $0x70] sm:$0xf]
    %v790 = vld [vmem:[%s3 + $0x74] sm:$0xf]
    %v791 = vld [vmem:[%s3 + $0x78] sm:$0xf]
    %v792 = vld [vmem:[%s3 + $0x7c] sm:$0xf]
    %v825 = vunpack.c.l.b16 %v761
    %v826 = vunpack.c.l.b16 %v762
    %v827 = vunpack.c.l.b16 %v763
    %v828 = vunpack.c.l.b16 %v764
    %v829 = vunpack.c.l.b16 %v765
    %v830 = vunpack.c.l.b16 %v766
    %v831 = vunpack.c.l.b16 %v767
    %v832 = vunpack.c.l.b16 %v768
    %v833 = vunpack.c.l.b16 %v769
    %v834 = vunpack.c.l.b16 %v770
    %v835 = vunpack.c.l.b16 %v771
    %v836 = vunpack.c.l.b16 %v772
    %v837 = vunpack.c.l.b16 %v773
    %v838 = vunpack.c.l.b16 %v774
    %v839 = vunpack.c.l.b16 %v775
    %v840 = vunpack.c.l.b16 %v776
    %v841 = vunpack.c.l.b16 %v777
    %v842 = vunpack.c.l.b16 %v778
    %v843 = vunpack.c.l.b16 %v779
    %v844 = vunpack.c.l.b16 %v780
    %v845 = vunpack.c.l.b16 %v781
    %v846 = vunpack.c.l.b16 %v782
    %v847 = vunpack.c.l.b16 %v783
    %v848 = vunpack.c.l.b16 %v784
    %v849 = vunpack.c.l.b16 %v785
    %v850 = vunpack.c.l.b16 %v786
    %v851 = vunpack.c.l.b16 %v787
    %v852 = vunpack.c.l.b16 %v788
    %v853 = vunpack.c.l.b16 %v789
    %v854 = vunpack.c.l.b16 %v790
    %v855 = vunpack.c.l.b16 %v791
    %v856 = vunpack.c.l.b16 %v792
    %v857 = vpack.c.b16 %v826, %v825
    %v858 = vpack.c.b16 %v828, %v827
    %v859 = vpack.c.b16 %v830, %v829
    %v860 = vpack.c.b16 %v832, %v831
    %v861 = vpack.c.b16 %v834, %v833
    %v862 = vpack.c.b16 %v836, %v835
    %v863 = vpack.c.b16 %v838, %v837
    %v864 = vpack.c.b16 %v840, %v839
    %v865 = vpack.c.b16 %v842, %v841
    %v866 = vpack.c.b16 %v844, %v843
    %v867 = vpack.c.b16 %v846, %v845
    %v868 = vpack.c.b16 %v848, %v847
    %v869 = vpack.c.b16 %v850, %v849
    %v870 = vpack.c.b16 %v852, %v851
    %v871 = vpack.c.b16 %v854, %v853
    %v872 = vpack.c.b16 %v856, %v855
    %889 = vmatprep.subr.bf16.mxu0 0
    %890 = vmatpush1.bf16.msra.mxu0 %v857
    %891 = vmatprep.subr.bf16.mxu0 0
    %892 = vmatpush1.bf16.msra.mxu0 %v858
    %893 = vmatprep.subr.bf16.mxu0 0
    %894 = vmatpush1.bf16.msra.mxu0 %v859
    %895 = vmatprep.subr.bf16.mxu0 0
    %896 = vmatpush1.bf16.msra.mxu0 %v860
    %897 = vmatprep.subr.bf16.mxu0 0
    %898 = vmatpush1.bf16.msra.mxu0 %v861
    %899 = vmatprep.subr.bf16.mxu0 0
    %900 = vmatpush1.bf16.msra.mxu0 %v862
    %901 = vmatprep.subr.bf16.mxu0 0
    %902 = vmatpush1.bf16.msra.mxu0 %v863
    %903 = vmatprep.subr.bf16.mxu0 0
    %904 = vmatpush1.bf16.msra.mxu0 %v864
    %905 = vmatprep.subr.bf16.mxu0 0
    %906 = vmatpush1.bf16.msra.mxu0 %v865
    %907 = vmatprep.subr.bf16.mxu0 0
    %908 = vmatpush1.bf16.msra.mxu0 %v866
    %909 = vmatprep.subr.bf16.mxu0 0
    %910 = vmatpush1.bf16.msra.mxu0 %v867
    %911 = vmatprep.subr.bf16.mxu0 0
    %912 = vmatpush1.bf16.msra.mxu0 %v868
    %913 = vmatprep.subr.bf16.mxu0 0
    %914 = vmatpush1.bf16.msra.mxu0 %v869
    %915 = vmatprep.subr.bf16.mxu0 0
    %916 = vmatpush1.bf16.msra.mxu0 %v870
    %917 = vmatprep.subr.bf16.mxu0 0
    %918 = vmatpush1.bf16.msra.mxu0 %v871
    %919 = vmatprep.subr.bf16.mxu0 0
    %920 = vmatpush1.bf16.msra.mxu0 %v872
    %921 = vmatprep.mubr.bf16.mxu0 %v760
    %922 = vmatmul.mubr.bf16.gmra.mrb[0].mxu0 %v759
    %v923 = vpop.f32.mrb[0].mxu0
    %v924 = vadd.f32 0.0, %v923
    %v925 = vpop.f32.mrb[0].mxu0
    %v926 = vpop.f32.mrb[0].mxu0
    %v927 = vpop.f32.mrb[0].mxu0
    %928 = vdwg.mxu0
    %v929 = vld [vmem:[%s6 + $0x8] sm:$0x1]
    %v930 = vld [vmem:[%s6 + $0x9] sm:$0x1]
    %v931 = vrot.slane %v924, 4
    %v932 = vadd.f32 %v924, %v931
    %v933 = vrot.slane %v932, 2
    %v934 = vadd.f32 %v932, %v933
    %v935 = vrot.slane %v934, 1
    %v936 = vadd.f32 %v934, %v935
    %v937 = vmul.f32 %v936, %v687
    %v938 = vsub.f32 %v924, %v937
    %v939 = vmul.f32 %v938, %v938
    %v940 = vrot.slane %v939, 4
    %v941 = vadd.f32 %v939, %v940
    %v942 = vrot.slane %v941, 2
    %v943 = vadd.f32 %v941, %v942
    %v944 = vrot.slane %v943, 1
    %v945 = vadd.f32 %v943, %v944
    %v946 = vmul.f32 %v945, %v687
    %v947 = vadd.f32 %v946, 1e-05
    %v948 = vrsqrt.pop %v947
    %v949 = vmul.f32 %v929, %v948
    %v951 = vlaneseq
    %v952 = vshrl.u32 %v951, 7
    %v953 = vsub.s32 0, %v952
    %v954 = vrot.slane %v949, %v953
    %v956 = vmul.f32 %v938, %v954
    %v958 = vlaneseq
    %v959 = vshrl.u32 %v958, 7
    %v960 = vsub.s32 0, %v959
    %v961 = vrot.slane %v930, %v960
    %v963 = vadd.f32 %v956, %v961
    %v964 = vmax.f32 %v963, 0.0
    %v965 = vpack.c.bf16 %v964, %v964
    %v966 = vld [vmem:[%s4] sm:$0xf]
    %v967 = vld [vmem:[%s4 + $0x4] sm:$0xf]
    %v968 = vld [vmem:[%s4 + $0x8] sm:$0xf]
    %v969 = vld [vmem:[%s4 + $0xc] sm:$0xf]
    %v970 = vld [vmem:[%s4 + $0x10] sm:$0xf]
    %v971 = vld [vmem:[%s4 + $0x14] sm:$0xf]
    %v972 = vld [vmem:[%s4 + $0x18] sm:$0xf]
    %v973 = vld [vmem:[%s4 + $0x1c] sm:$0xf]
    %v974 = vld [vmem:[%s4 + $0x20] sm:$0xf]
    %v975 = vld [vmem:[%s4 + $0x24] sm:$0xf]
    %v976 = vld [vmem:[%s4 + $0x28] sm:$0xf]
    %v977 = vld [vmem:[%s4 + $0x2c] sm:$0xf]
    %v978 = vld [vmem:[%s4 + $0x30] sm:$0xf]
    %v979 = vld [vmem:[%s4 + $0x34] sm:$0xf]
    %v980 = vld [vmem:[%s4 + $0x38] sm:$0xf]
    %v981 = vld [vmem:[%s4 + $0x3c] sm:$0xf]
    %v998 = vunpack.c.l.b16 %v966
    %v999 = vunpack.c.l.b16 %v967
    %v1000 = vunpack.c.l.b16 %v968
    %v1001 = vunpack.c.l.b16 %v969
    %v1002 = vunpack.c.l.b16 %v970
    %v1003 = vunpack.c.l.b16 %v971
    %v1004 = vunpack.c.l.b16 %v972
    %v1005 = vunpack.c.l.b16 %v973
    %v1006 = vunpack.c.l.b16 %v974
    %v1007 = vunpack.c.l.b16 %v975
    %v1008 = vunpack.c.l.b16 %v976
    %v1009 = vunpack.c.l.b16 %v977
    %v1010 = vunpack.c.l.b16 %v978
    %v1011 = vunpack.c.l.b16 %v979
    %v1012 = vunpack.c.l.b16 %v980
    %v1013 = vunpack.c.l.b16 %v981
    %v1014 = vpack.c.b16 %v999, %v998
    %v1015 = vpack.c.b16 %v1001, %v1000
    %v1016 = vpack.c.b16 %v1003, %v1002
    %v1017 = vpack.c.b16 %v1005, %v1004
    %v1018 = vpack.c.b16 %v1007, %v1006
    %v1019 = vpack.c.b16 %v1009, %v1008
    %v1020 = vpack.c.b16 %v1011, %v1010
    %v1021 = vpack.c.b16 %v1013, %v1012
    %1030 = vmatprep.subr.bf16.mxu0 0
    %1031 = vmatpush1.bf16.msra.mxu0 %v1014
    %1032 = vmatprep.subr.bf16.mxu0 0
    %1033 = vmatpush1.bf16.msra.mxu0 %v1015
    %1034 = vmatprep.subr.bf16.mxu0 0
    %1035 = vmatpush1.bf16.msra.mxu0 %v1016
    %1036 = vmatprep.subr.bf16.mxu0 0
    %1037 = vmatpush1.bf16.msra.mxu0 %v1017
    %1038 = vmatprep.subr.bf16.mxu0 0
    %1039 = vmatpush1.bf16.msra.mxu0 %v1018
    %1040 = vmatprep.subr.bf16.mxu0 0
    %1041 = vmatpush1.bf16.msra.mxu0 %v1019
    %1042 = vmatprep.subr.bf16.mxu0 0
    %1043 = vmatpush1.bf16.msra.mxu0 %v1020
    %1044 = vmatprep.subr.bf16.mxu0 0
    %1045 = vmatpush1.bf16.msra.mxu0 %v1021
    %1046 = vmatprep.subr.bf16.mxu0 0
    %1047 = vmatpush1.bf16.msra.mxu0 0
    %1048 = vmatprep.subr.bf16.mxu0 0
    %1049 = vmatpush1.bf16.msra.mxu0 0
    %1050 = vmatprep.subr.bf16.mxu0 0
    %1051 = vmatpush1.bf16.msra.mxu0 0
    %1052 = vmatprep.subr.bf16.mxu0 0
    %1053 = vmatpush1.bf16.msra.mxu0 0
    %1054 = vmatprep.subr.bf16.mxu0 0
    %1055 = vmatpush1.bf16.msra.mxu0 0
    %1056 = vmatprep.subr.bf16.mxu0 0
    %1057 = vmatpush1.bf16.msra.mxu0 0
    %1058 = vmatprep.subr.bf16.mxu0 0
    %1059 = vmatpush1.bf16.msra.mxu0 0
    %1060 = vmatprep.subr.bf16.mxu0 0
    %1061 = vmatpush1.bf16.msra.mxu0 0
    %1062 = vmatprep.mubr.bf16.mxu0 0
    %1063 = vmatmul.mubr.bf16.gmra.mrb[0].mxu0 %v965
    %v1064 = vpop.f32.mrb[0].mxu0
    %v1065 = vadd.f32 0.0, %v1064
    %v1066 = vpop.f32.mrb[0].mxu0
    %v1067 = vpop.f32.mrb[0].mxu0
    %v1068 = vpop.f32.mrb[0].mxu0
    %1069 = vdwg.mxu0
    %v1070 = vld [vmem:[%s6 + $0xa] sm:$0x1]
    %v1071 = vld [vmem:[%s6 + $0xb] sm:$0x1]
    %v1072 = vrot.slane %v1065, 4
    %v1073 = vadd.f32 %v1065, %v1072
    %v1074 = vrot.slane %v1073, 2
    %v1075 = vadd.f32 %v1073, %v1074
    %v1076 = vrot.slane %v1075, 1
    %v1077 = vadd.f32 %v1075, %v1076
    %v1078 = vmul.f32 %v1077, %v687
    %v1079 = vsub.f32 %v1065, %v1078
    %v1080 = vmul.f32 %v1079, %v1079
    %v1081 = vrot.slane %v1080, 4
    %v1082 = vadd.f32 %v1080, %v1081
    %v1083 = vrot.slane %v1082, 2
    %v1084 = vadd.f32 %v1082, %v1083
    %v1085 = vrot.slane %v1084, 1
    %v1086 = vadd.f32 %v1084, %v1085
    %v1087 = vmul.f32 %v1086, %v687
    %v1088 = vadd.f32 %v1087, 1e-05
    %v1089 = vrsqrt.pop %v1088
    %v1090 = vmul.f32 %v1070, %v1089
    %v1092 = vlaneseq
    %v1093 = vshrl.u32 %v1092, 7
    %v1094 = vsub.s32 0, %v1093
    %v1095 = vrot.slane %v1090, %v1094
    %v1097 = vmul.f32 %v1079, %v1095
    %v1099 = vlaneseq
    %v1100 = vshrl.u32 %v1099, 7
    %v1101 = vsub.s32 0, %v1100
    %v1102 = vrot.slane %v1071, %v1101
    %v1104 = vadd.f32 %v1097, %v1102
    %v1105 = vmax.f32 %v1104, 0.0
    %v1106 = vpack.c.bf16 %v1105, %v1105
    %v1107 = vld [vmem:[%s5] sm:$0xf]
    %v1108 = vld [vmem:[%s5 + $0x4] sm:$0xf]
    %v1109 = vld [vmem:[%s5 + $0x8] sm:$0xf]
    %v1110 = vld [vmem:[%s5 + $0xc] sm:$0xf]
    %v1111 = vld [vmem:[%s5 + $0x10] sm:$0xf]
    %v1112 = vld [vmem:[%s5 + $0x14] sm:$0xf]
    %v1113 = vld [vmem:[%s5 + $0x18] sm:$0xf]
    %v1114 = vld [vmem:[%s5 + $0x1c] sm:$0xf]
    %v1115 = vld [vmem:[%s5 + $0x20] sm:$0xf]
    %v1116 = vld [vmem:[%s5 + $0x24] sm:$0xf]
    %v1117 = vld [vmem:[%s5 + $0x28] sm:$0xf]
    %v1118 = vld [vmem:[%s5 + $0x2c] sm:$0xf]
    %v1119 = vld [vmem:[%s5 + $0x30] sm:$0xf]
    %v1120 = vld [vmem:[%s5 + $0x34] sm:$0xf]
    %v1121 = vld [vmem:[%s5 + $0x38] sm:$0xf]
    %v1122 = vld [vmem:[%s5 + $0x3c] sm:$0xf]
    %v1123 = vld [vmem:[%s6 + $0xc] sm:$0x1]
    %v1125 = vlaneseq
    %v1126 = vshrl.u32 %v1125, 7
    %v1127 = vsub.s32 0, %v1126
    %v1128 = vrot.slane %v1123, %v1127
    %v1146 = vunpack.c.l.b16 %v1107
    %v1147 = vunpack.c.l.b16 %v1108
    %v1148 = vunpack.c.l.b16 %v1109
    %v1149 = vunpack.c.l.b16 %v1110
    %v1150 = vunpack.c.l.b16 %v1111
    %v1151 = vunpack.c.l.b16 %v1112
    %v1152 = vunpack.c.l.b16 %v1113
    %v1153 = vunpack.c.l.b16 %v1114
    %v1154 = vunpack.c.l.b16 %v1115
    %v1155 = vunpack.c.l.b16 %v1116
    %v1156 = vunpack.c.l.b16 %v1117
    %v1157 = vunpack.c.l.b16 %v1118
    %v1158 = vunpack.c.l.b16 %v1119
    %v1159 = vunpack.c.l.b16 %v1120
    %v1160 = vunpack.c.l.b16 %v1121
    %v1161 = vunpack.c.l.b16 %v1122
    %v1162 = vpack.c.b16 %v1147, %v1146
    %v1163 = vpack.c.b16 %v1149, %v1148
    %v1164 = vpack.c.b16 %v1151, %v1150
    %v1165 = vpack.c.b16 %v1153, %v1152
    %v1166 = vpack.c.b16 %v1155, %v1154
    %v1167 = vpack.c.b16 %v1157, %v1156
    %v1168 = vpack.c.b16 %v1159, %v1158
    %v1169 = vpack.c.b16 %v1161, %v1160
    %1178 = vmatprep.subr.bf16.mxu0 0
    %1179 = vmatpush1.bf16.msra.mxu0 %v1162
    %1180 = vmatprep.subr.bf16.mxu0 0
    %1181 = vmatpush1.bf16.msra.mxu0 %v1163
    %1182 = vmatprep.subr.bf16.mxu0 0
    %1183 = vmatpush1.bf16.msra.mxu0 %v1164
    %1184 = vmatprep.subr.bf16.mxu0 0
    %1185 = vmatpush1.bf16.msra.mxu0 %v1165
    %1186 = vmatprep.subr.bf16.mxu0 0
    %1187 = vmatpush1.bf16.msra.mxu0 %v1166
    %1188 = vmatprep.subr.bf16.mxu0 0
    %1189 = vmatpush1.bf16.msra.mxu0 %v1167
    %1190 = vmatprep.subr.bf16.mxu0 0
    %1191 = vmatpush1.bf16.msra.mxu0 %v1168
    %1192 = vmatprep.subr.bf16.mxu0 0
    %1193 = vmatpush1.bf16.msra.mxu0 %v1169
    %1194 = vmatprep.subr.bf16.mxu0 0
    %1195 = vmatpush1.bf16.msra.mxu0 0
    %1196 = vmatprep.subr.bf16.mxu0 0
    %1197 = vmatpush1.bf16.msra.mxu0 0
    %1198 = vmatprep.subr.bf16.mxu0 0
    %1199 = vmatpush1.bf16.msra.mxu0 0
    %1200 = vmatprep.subr.bf16.mxu0 0
    %1201 = vmatpush1.bf16.msra.mxu0 0
    %1202 = vmatprep.subr.bf16.mxu0 0
    %1203 = vmatpush1.bf16.msra.mxu0 0
    %1204 = vmatprep.subr.bf16.mxu0 0
    %1205 = vmatpush1.bf16.msra.mxu0 0
    %1206 = vmatprep.subr.bf16.mxu0 0
    %1207 = vmatpush1.bf16.msra.mxu0 0
    %1208 = vmatprep.subr.bf16.mxu0 0
    %1209 = vmatpush1.bf16.msra.mxu0 0
    %1210 = vmatprep.mubr.bf16.mxu0 0
    %1211 = vmatmul.mubr.bf16.gmra.mrb[0].mxu0 %v1106
    %v1212 = vpop.f32.mrb[0].mxu0
    %v1213 = vadd.f32 %v1128, %v1212
    %v1214 = vpop.f32.mrb[0].mxu0
    %v1215 = vpop.f32.mrb[0].mxu0
    %v1216 = vpop.f32.mrb[0].mxu0
    %1217 = vdwg.mxu0
    %v1218 = vmax.f32 %v1213, 0.0
    %1219 = vst [vmem:[#allocation5] sm:$0xff] %v1218
    // Predicated region
    $region34: #{network_forward.1} parent=1 // pred_check
      _
    $region35: #{network_forward.1} parent=1 // pred_check_branch
      %1221 = sbr.rel (0) target = $region37
    $region36: #{network_forward.1} parent=1 // pred_region
      %s1223 = ssub.s32 128, 128
      %1224 = vsyncadd [#allocation4], %s1223
      %s1226 = sshll.u32 [#allocation5], 4
      %s1227 = int_to_ptr.vmem [resolvable:$true] %s1226
      %1229 = dma.vmem_to_hbm [thread:$0]  %s1227, 128, %s7, [#allocation4]
    $region37: #{network_forward.1} parent=1 // pred_fallthru
      _
    // Predicated region
    $region38: #{network_forward.1} parent=1 // pred_check
      _
    $region39: #{network_forward.1} parent=1 // pred_check_branch
      %1231 = sbr.rel (0) target = $region41
    $region40: #{network_forward.1} parent=1 // pred_region
      %1232 = dma.done [#allocation4], 128
    $region41: #{network_forward.1} parent=1 // pred_fallthru
      _
    %1233 = vsyncpa [#allocation3], 1
    %1234 = vsyncpa [#allocation4], 1

</llo_original>
